<compile_context>
chip_gen: v6e
topology: v6e:2x2x1
jax: 0.10.0
libtpu: 0.0.40
codegen_flags: <defaults>
</compile_context>

<pallas_src>
import functools

import jax
import jax.numpy as jnp
from jax.experimental import pallas as pl
from jax.experimental.pallas import tpu as pltpu


def _round_up(n, m):
    return ((n + m - 1) // m) * m


def _tpu_plan():
    """(max_tile, vmem_limit_bytes), generation-aware with a safe fallback."""
    max_tile, vmem_limit = 512, 44 * 1024 * 1024          # safe for v7x (64 MiB)
    try:
        info = pltpu.get_tpu_info()
        cap = getattr(info, "vmem_capacity_bytes", None)
        if cap is not None and cap >= 96 * 1024 * 1024:    # v5e / v6e (128 MiB)
            max_tile, vmem_limit = 1024, 80 * 1024 * 1024
    except Exception:
        pass
    return max_tile, vmem_limit


def _axis_plan(n, max_tile):
    """(padded, row_tile, red_tile) for a node/feature axis.

    Small axes: pad to a multiple of 16 and split rows into 2 tiles so the
    'parallel' grid axis feeds both v7x TensorCores; the reduction tile is the
    full padded axis (block == full dim, so no 128-divisibility needed).
    Large axes: pad to a multiple of max_tile (multiple of 128), tile by it.
    """
    if n <= max_tile:
        p = _round_up(n, 16)
        return p, p // 2, p
    p = _round_up(n, max_tile)
    return p, max_tile, max_tile


# --------------------------------------------------------------------------
# Kernels
# --------------------------------------------------------------------------
def _project_kernel(x_ref, w_ref, o_ref, acc_ref):
    """support1 = x @ W1, K(=nfeat)-tiled with an f32 accumulator."""
    k = pl.program_id(1)

    @pl.when(k == 0)
    def _():
        acc_ref[...] = jnp.zeros_like(acc_ref)

    acc_ref[...] += jnp.dot(x_ref[...], w_ref[...],
                            preferred_element_type=jnp.float32)

    @pl.when(k == pl.num_programs(1) - 1)
    def _():
        o_ref[...] = acc_ref[...].astype(o_ref.dtype)


def _gcn_relu_project_kernel(adj_ref, s_ref, b_ref, w2_ref, o_ref, acc_ref,
                             *, s_block_rows):
    """Layer 1 fused with the layer-2 projection:
       out_tile = relu(adj0_tile @ support1 + b1) @ W2
       grid = (row_tiles, src_tiles); src axis accumulates in f32 VMEM scratch.
       s_block_rows is not None  <=>  support1 is VMEM-resident (slice by k).
    """
    k = pl.program_id(1)

    @pl.when(k == 0)
    def _():
        acc_ref[...] = jnp.zeros_like(acc_ref)

    if s_block_rows is None:
        s = s_ref[...]
    else:
        start = pl.multiple_of(k * s_block_rows, s_block_rows)
        s = s_ref[pl.ds(start, s_block_rows), :]

    acc_ref[...] += jnp.dot(adj_ref[...], s,
                            preferred_element_type=jnp.float32)

    @pl.when(k == pl.num_programs(1) - 1)
    def _():
        h = jnp.maximum(acc_ref[...] + b_ref[...], 0.0)   # gc1 bias + ReLU
        # F.dropout is identity in eval mode (omitted).
        o_ref[...] = jnp.dot(h.astype(w2_ref.dtype), w2_ref[...],
                             preferred_element_type=jnp.float32
                             ).astype(o_ref.dtype)


def _gcn_logsoftmax_kernel(adj_ref, s_ref, b_ref, o_ref,
                           *, s_block_rows, nclass):
    """Layer 2 aggregation + masked log_softmax(dim=1), accumulating directly
    into the resident output block (block index constant across k)."""
    k = pl.program_id(1)

    @pl.when(k == 0)
    def _():
        o_ref[...] = jnp.zeros_like(o_ref)

    if s_block_rows is None:
        s = s_ref[...]
    else:
        start = pl.multiple_of(k * s_block_rows, s_block_rows)
        s = s_ref[pl.ds(start, s_block_rows), :]

    o_ref[...] += jnp.dot(adj_ref[...], s,
                          preferred_element_type=jnp.float32)

    @pl.when(k == pl.num_programs(1) - 1)
    def _():
        y = o_ref[...] + b_ref[...]
        # Mask the lane-padding beyond the real class count before softmax.
        col = jax.lax.broadcasted_iota(jnp.int32, y.shape, 1)
        y = jnp.where(col < nclass, y, jnp.float32(-1e30))
        y = y - jnp.max(y, axis=-1, keepdims=True)
        lse = jnp.log(jnp.sum(jnp.exp(y), axis=-1, keepdims=True))
        o_ref[...] = y - lse


# --------------------------------------------------------------------------
# Forward wrapper
# --------------------------------------------------------------------------
def fastgcn_forward(x, adj0, adj1, params):
    n0, nfeat = x.shape
    n1, _ = adj0.shape
    n2, _ = adj1.shape
    nhid = params["w1"].shape[1]
    nclass = params["w2"].shape[1]
    assert adj0.shape == (n1, n0) and adj1.shape == (n2, n1)

    max_tile, vmem_limit = _tpu_plan()

    p0, r0, k0 = _axis_plan(n0, max_tile)       # input-node axis
    p1, r1, k1 = _axis_plan(n1, max_tile)       # layer-1 node axis
    p2, r2, _ = _axis_plan(n2, max_tile)        # output-node axis
    pf, _, kf = _axis_plan(nfeat, max_tile)     # feature (K) axis
    nhid_p = _round_up(nhid, 128)               # lane-dense hidden width
    nclass_p = _round_up(nclass, 128)           # lane-dense class width

    f32, bf16 = jnp.float32, jnp.bfloat16

    # Zero-pad node/feature/channel axes (glue, not the hot path). Padded
    # adjacency rows/cols are zero so they contribute nothing; padded hidden
    # columns of W1/b1 and rows/cols of W2/b2 are zero so padded lanes stay
    # exact; padded output rows / class lanes are sliced off at the end.
    xp = jnp.zeros((p0, pf), f32).at[:n0, :nfeat].set(x).astype(bf16)
    a0 = jnp.zeros((p1, p0), f32).at[:n1, :n0].set(adj0).astype(bf16)
    a1 = jnp.zeros((p2, p1), f32).at[:n2, :n1].set(adj1).astype(bf16)

    w1 = jnp.zeros((pf, nhid_p), f32).at[:nfeat, :nhid].set(
        params["w1"]).astype(bf16)
    b1 = jnp.zeros((1, nhid_p), f32).at[:, :nhid].set(params["b1"])
    w2 = jnp.zeros((nhid_p, nclass_p), f32).at[:nhid, :nclass].set(
        params["w2"]).astype(bf16)
    b2 = jnp.zeros((1, nclass_p), f32).at[:, :nclass].set(params["b2"])

    # ---------------- support1 = x @ W1 (computed once, bf16 out) ------------
    support1 = pl.pallas_call(
        _project_kernel,
        out_shape=jax.ShapeDtypeStruct((p0, nhid_p), bf16),
        grid_spec=pltpu.PrefetchScalarGridSpec(
            num_scalar_prefetch=0,
            grid=(p0 // r0, pf // kf),
            in_specs=[
                pl.BlockSpec((r0, kf), lambda i, k: (i, k)),       # x tile
                pl.BlockSpec((kf, nhid_p), lambda i, k: (k, 0)),   # W1 tile
            ],
            out_specs=pl.BlockSpec((r0, nhid_p), lambda i, k: (i, 0)),
            scratch_shapes=[pltpu.VMEM((r0, nhid_p), jnp.float32)],
        ),
        compiler_params=pltpu.CompilerParams(
            dimension_semantics=("parallel", "arbitrary"),
            vmem_limit_bytes=vmem_limit),
    )(xp, w1)

    # -------- support2 = relu(adj0 @ support1 + b1) @ W2 (fused, bf16) -------
    s1_resident = (p0 * nhid_p * 2 * 2) <= (vmem_limit // 4)
    if s1_resident:
        s1_spec = pl.BlockSpec((p0, nhid_p), lambda i, k: (0, 0))
        s1_rows = k0
    else:
        s1_spec = pl.BlockSpec((k0, nhid_p), lambda i, k: (k, 0))
        s1_rows = None

    support2 = pl.pallas_call(
        functools.partial(_gcn_relu_project_kernel, s_block_rows=s1_rows),
        out_shape=jax.ShapeDtypeStruct((p1, nclass_p), bf16),
        grid_spec=pltpu.PrefetchScalarGridSpec(
            num_scalar_prefetch=0,
            grid=(p1 // r1, p0 // k0),
            in_specs=[
                pl.BlockSpec((r1, k0), lambda i, k: (i, k)),        # adj0 tile
                s1_spec,                                            # support1
                pl.BlockSpec((1, nhid_p), lambda i, k: (0, 0)),     # b1
                pl.BlockSpec((nhid_p, nclass_p), lambda i, k: (0, 0)),  # W2
            ],
            out_specs=pl.BlockSpec((r1, nclass_p), lambda i, k: (i, 0)),
            scratch_shapes=[pltpu.VMEM((r1, nhid_p), jnp.float32)],
        ),
        compiler_params=pltpu.CompilerParams(
            dimension_semantics=("parallel", "arbitrary"),
            vmem_limit_bytes=vmem_limit),
    )(a0, support1, b1, w2)

    # ---------- out = log_softmax(adj1 @ support2 + b2, dim=1) ---------------
    s2_resident = (p1 * nclass_p * 2 * 2) <= (vmem_limit // 4)
    if s2_resident:
        s2_spec = pl.BlockSpec((p1, nclass_p), lambda i, k: (0, 0))
        s2_rows = k1
    else:
        s2_spec = pl.BlockSpec((k1, nclass_p), lambda i, k: (k, 0))
        s2_rows = None

    out = pl.pallas_call(
        functools.partial(_gcn_logsoftmax_kernel,
                          s_block_rows=s2_rows, nclass=nclass),
        out_shape=jax.ShapeDtypeStruct((p2, nclass_p), jnp.float32),
        grid_spec=pltpu.PrefetchScalarGridSpec(
            num_scalar_prefetch=0,
            grid=(p2 // r2, p1 // k1),
            in_specs=[
                pl.BlockSpec((r2, k1), lambda i, k: (i, k)),        # adj1 tile
                s2_spec,                                            # support2
                pl.BlockSpec((1, nclass_p), lambda i, k: (0, 0)),   # b2
            ],
            out_specs=pl.BlockSpec((r2, nclass_p), lambda i, k: (i, 0)),
        ),
        compiler_params=pltpu.CompilerParams(
            dimension_semantics=("parallel", "arbitrary"),
            vmem_limit_bytes=vmem_limit),
    )(a1, support2, b2)

    return out[:n2, :nclass]


# --------------------------------------------------------------------------
# Parameter init / demo
# --------------------------------------------------------------------------
def init_params(key, nfeat, nhid, nclass):
    k1, k2, k3, k4 = jax.random.split(key, 4)

    def glorot(k, shape):
        bound = jnp.sqrt(6.0 / (shape[0] + shape[1]))
        return jax.random.uniform(k, shape, jnp.float32, -bound, bound)

    return {
        "w1": glorot(k1, (nfeat, nhid)),
        "b1": 0.01 * jax.random.normal(k2, (1, nhid), jnp.float32),
        "w2": glorot(k3, (nhid, nclass)),
        "b2": 0.01 * jax.random.normal(k4, (1, nclass), jnp.float32),
    }


def make_adj(key, rows, cols, p=0.25):
    """Dense, row-normalized sampled adjacency (FastGCN style)."""
    a = (jax.random.uniform(key, (rows, cols)) < p).astype(jnp.float32)
    deg = jnp.maximum(jnp.sum(a, axis=1, keepdims=True), 1.0)
    return a / deg


if __name__ == "__main__":
    # Small shapes consistent with the module: sampled node counts per layer.
    n0, n1, n2 = 64, 32, 16           # input / layer-1 / output node counts
    nfeat, nhid, nclass = 32, 32, 8

    key = jax.random.PRNGKey(0)
    kx, ka0, ka1, kp = jax.random.split(key, 4)
    x = jax.random.normal(kx, (n0, nfeat), jnp.float32)
    adj0 = make_adj(ka0, n1, n0)      # (n1, n0)
    adj1 = make_adj(ka1, n2, n1)      # (n2, n1)
    params = init_params(kp, nfeat, nhid, nclass)

    out = jax.block_until_ready(fastgcn_forward(x, adj0, adj1, params))

    # Pure-JAX f32 reference (eval mode: dropout is identity).
    h1_ref = jnp.maximum(adj0 @ (x @ params["w1"]) + params["b1"], 0.0)
    ref = jax.nn.log_softmax(adj1 @ (h1_ref @ params["w2"]) + params["b2"],
                             axis=1)

    assert out.shape == (n2, nclass)
    assert bool(jnp.all(jnp.isfinite(out)))
    # log_softmax invariant (computed in f32 inside the kernel): rows sum to 1.
    assert bool(jnp.allclose(jnp.sum(jnp.exp(out), axis=1), 1.0, atol=1e-3))
    # bf16 streaming loosens numerics vs the f32 reference.
    assert bool(jnp.allclose(out, ref, atol=2e-2, rtol=1e-2))
    print("KERNEL_OK")
</pallas_src>

<mosaic_0001>
module attributes {stable_mosaic.version = 11 : i64} {
  func.func @_project_kernel(%arg0: i32, %arg1: i32, %arg2: memref<32x32xbf16, #tpu.memory_space<vmem>>, %arg3: memref<32x128xbf16, #tpu.memory_space<vmem>>, %arg4: memref<32x128xbf16, #tpu.memory_space<vmem>>, %arg5: memref<32x128xf32, #tpu.memory_space<vmem>>) attributes {dimension_semantics = [#tpu.dimension_semantics<parallel>, #tpu.dimension_semantics<arbitrary>], iteration_bounds = array<i64: 2, 1>, scalar_prefetch = 0 : i64, scratch_operands = 1 : i64, tpu.core_type = #tpu.core_type<tc>, window_params = [{transform_indices = @transform_0, window_bounds = array<i64: 32, 32>}, {transform_indices = @transform_1, window_bounds = array<i64: 32, 128>}, {transform_indices = @transform_2, window_bounds = array<i64: 32, 128>}]} {
    %c0_i32 = arith.constant 0 : i32
    %0 = arith.cmpi eq, %arg1, %c0_i32 : i32
    %1 = arith.extui %0 : i1 to i32
    %c0_i32_0 = arith.constant 0 : i32
    %2 = arith.cmpi ne, %1, %c0_i32_0 : i32
    scf.if %2 {
      %cst_10 = arith.constant 0.000000e+00 : f32
      %12 = vector.broadcast %cst_10 : f32 to vector<32x128xf32>
      %c0_11 = arith.constant 0 : index
      %c0_12 = arith.constant 0 : index
      %13 = vector.load %arg5[%c0_11, %c0_12] : memref<32x128xf32, #tpu.memory_space<vmem>>, vector<32x128xf32>
      tpu.vector_store %arg5[%c0_11, %c0_12], %12 {strides = array<i32>} : memref<32x128xf32, #tpu.memory_space<vmem>>, vector<32x128xf32>,
    } else {
    }
    %c0 = arith.constant 0 : index
    %c0_1 = arith.constant 0 : index
    %3 = vector.load %arg5[%c0, %c0_1] : memref<32x128xf32, #tpu.memory_space<vmem>>, vector<32x128xf32>
    %c0_2 = arith.constant 0 : index
    %c0_3 = arith.constant 0 : index
    %4 = vector.load %arg2[%c0_2, %c0_3] : memref<32x32xbf16, #tpu.memory_space<vmem>>, vector<32x32xbf16>
    %c0_4 = arith.constant 0 : index
    %c0_5 = arith.constant 0 : index
    %5 = vector.load %arg3[%c0_4, %c0_5] : memref<32x128xbf16, #tpu.memory_space<vmem>>, vector<32x128xbf16>
    %cst = arith.constant dense<0.000000e+00> : vector<32x128xf32>
    %6 = tpu.matmul %4, %5, %cst {dimension_numbers = #tpu.dot_dimension_numbers<[1], [0], [0], [1], [0, 0, 1, 1], [], []>} : vector<32x32xbf16>, vector<32x128xbf16>, vector<32x128xf32> -> vector<32x128xf32>
    %7 = arith.addf %3, %6 : vector<32x128xf32>
    %c0_6 = arith.constant 0 : index
    %c0_7 = arith.constant 0 : index
    %8 = vector.load %arg5[%c0_6, %c0_7] : memref<32x128xf32, #tpu.memory_space<vmem>>, vector<32x128xf32>
    tpu.vector_store %arg5[%c0_6, %c0_7], %7 {strides = array<i32>} : memref<32x128xf32, #tpu.memory_space<vmem>>, vector<32x128xf32>,
    %c0_i32_8 = arith.constant 0 : i32
    %9 = arith.cmpi eq, %arg1, %c0_i32_8 : i32
    %10 = arith.extui %9 : i1 to i32
    %c0_i32_9 = arith.constant 0 : i32
    %11 = arith.cmpi ne, %10, %c0_i32_9 : i32
    scf.if %11 {
      %c0_10 = arith.constant 0 : index
      %c0_11 = arith.constant 0 : index
      %12 = vector.load %arg5[%c0_10, %c0_11] : memref<32x128xf32, #tpu.memory_space<vmem>>, vector<32x128xf32>
      %13 = arith.truncf %12 : vector<32x128xf32> to vector<32x128xbf16>
      %c0_12 = arith.constant 0 : index
      %c0_13 = arith.constant 0 : index
      %14 = vector.load %arg4[%c0_12, %c0_13] : memref<32x128xbf16, #tpu.memory_space<vmem>>, vector<32x128xbf16>
      tpu.vector_store %arg4[%c0_12, %c0_13], %13 {strides = array<i32>} : memref<32x128xbf16, #tpu.memory_space<vmem>>, vector<32x128xbf16>,
    } else {
    }
    return
  }
  func.func @transform_0(%arg0: i32, %arg1: i32) -> (i32, i32) {
    %c0_i32 = arith.constant 0 : i32
    return %arg0, %arg1 : i32, i32
  }
  func.func @transform_1(%arg0: i32, %arg1: i32) -> (i32, i32) {
    %c0_i32 = arith.constant 0 : i32
    %c0_i32_0 = arith.constant 0 : i32
    return %arg1, %c0_i32 : i32, i32
  }
  func.func @transform_2(%arg0: i32, %arg1: i32) -> (i32, i32) {
    %c0_i32 = arith.constant 0 : i32
    %c0_i32_0 = arith.constant 0 : i32
    return %arg0, %c0_i32 : i32, i32
  }
}

</mosaic_0001>

<llo_original>
// kernel: tpu_custom_call.1
$region0: #{tpu_custom_call.1}
  #allocation0 [shape = 'u32[]', space=smem, size = 0x4, offset = 0x4, fixed_abs, tag = 'smem constant byte address 0x4 - core index']
  #allocation1 [shape = 'u32[144,128]{1,0:T(1,128)}', space=vmem, size = 0x12000, scoped, tag = 'internal scratch']
  #allocation2 [shape = 'f32[32,128]{1,0:T(8,128)}', space=vmem, size = 0x4000, scoped, tag = 'scratch operand']
  %s0 = inlined_call_operand.vmem [shape: bf16[64,32], index: 0, kind: input, shape index: {}]
  %s1 = inlined_call_operand.vmem [shape: bf16[32,128], index: 1, kind: input, shape index: {}]
  %s2 = inlined_call_operand.hbm [shape: bf16[64,128], index: 2, kind: output, shape index: {}]
  %s3 = sld [smem:[#allocation0]]
  $region49: #{tpu_custom_call.1} parent=0
    _
  %s5 = ssub.s32 1, %s3
  %s6 = scalar_select 0, %s5, %s3
  $region1: #{tpu_custom_call.1} parent=0
    #allocation3 [shape = 'u8[16384]{0}', space=vmem, size = 0x4000, scoped, tag = 'output window, operand 0']
    #allocation4 [shape = 's32[2]{0}', space=sflag, size = 0x8, scoped, tag = 'scoped memory for tpu_custom_call.1']
    %7 = vsyncpa [#allocation4], 0
    %s8 = scalar_lea.sflag [#allocation4], 1
    %9 = vsyncpa %s8, 0
    loop: start=0, step=1, limit=4
    $region2: #{tpu_custom_call.1} parent=1 // loop_pre_header
      _
    $region3: #{tpu_custom_call.1} parent=1 // loop_header
      %s11 = sphi 0, %s15
      %p12 = scmp.ge.s32.totalorder %s11, 4
      %s18 = sphi 0, %s30
      %s19 = sphi 0, %s26
      %s20 = sphi 0, %s18
      %s21 = sphi 0, %s19
      %s22 = sphi 0, %s20
      %s23 = sphi 0, %s21
      %s35 = sphi 0, %s37
      %s38 = sphi 0, %s35
      %s39 = sphi 0, %s38
      %s55 = sphi 0, %s39
      %s61 = sphi 0, %s63
      %s64 = sphi 0, %s61
      %s65 = sphi 0, %s64
      %s81 = sphi 0, %s65
      %s87 = sphi 0, %s89
      %s90 = sphi 0, %s87
      %s91 = sphi 0, %s90
      %s107 = sphi 0, %s91
    $region4: #{tpu_custom_call.1} parent=1 // loop_header_branch
      %14 = sbr.rel (%p12) target = $region8
    $region5: #{tpu_custom_call.1} parent=1 // loop_body
      %s16 = ssub.s32 %s11, 1
      %s17 = ssub.s32 %s11, 2
      %s24 = sadd.s32 1, %s19
      %p25 = scmp.ge.s32.totalorder %s24, 1
      %s26 = scalar_select %p25, 0, %s24
      %s27 = sadd.s32 1, %s18
      %s28 = scalar_select %p25, %s27, %s18
      %p29 = scmp.ge.s32.totalorder %s28, 2
      %s30 = scalar_select %p29, 0, %s28
      %s31 = ssub.s32 %s18, %s30
      %s32 = ssub.s32 %s19, %s26
      %s33 = sor.u32 %s31, %s32
      %p34 = scmp.eq.s32.totalorder %s33, 0
      %s36 = sadd.s32 %s35, 1
      %s37 = scalar_select %p34, %s35, %s36
      %p40 = pneg %p34
      %p41 = scmp.eq.s32.totalorder %s11, 1
      %p42 = por %p40, %p41
      %p43 = scmp.ne.s32.totalorder %s35, %s38
      %p44 = scmp.eq.s32.totalorder %s11, 0
      %p45 = por %p43, %p44
      %p46 = scmp.ne.s32.totalorder %s35, %s38
      %p47 = scmp.eq.s32.totalorder %s16, 1
      %p48 = por %p46, %p47
      %p49 = scmp.ne.s32.totalorder %s38, %s39
      %p50 = scmp.eq.s32.totalorder %s16, 0
      %p51 = por %p49, %p50
      %p52 = scmp.ne.s32.totalorder %s38, %s39
      %p53 = scmp.eq.s32.totalorder %s17, 1
      %p54 = por %p52, %p53
      %p56 = scmp.ne.s32.totalorder %s39, %s55
      %p57 = scmp.eq.s32.totalorder %s17, 0
      %p58 = por %p56, %p57
      %s59 = ssub.s32 %s19, %s26
      %p60 = scmp.eq.s32.totalorder %s59, 0
      %s62 = sadd.s32 %s61, 1
      %s63 = scalar_select %p60, %s61, %s62
      %p66 = pneg %p60
      %p67 = scmp.eq.s32.totalorder %s11, 1
      %p68 = por %p66, %p67
      %p69 = scmp.ne.s32.totalorder %s61, %s64
      %p70 = scmp.eq.s32.totalorder %s11, 0
      %p71 = por %p69, %p70
      %p72 = scmp.ne.s32.totalorder %s61, %s64
      %p73 = scmp.eq.s32.totalorder %s16, 1
      %p74 = por %p72, %p73
      %p75 = scmp.ne.s32.totalorder %s64, %s65
      %p76 = scmp.eq.s32.totalorder %s16, 0
      %p77 = por %p75, %p76
      %p78 = scmp.ne.s32.totalorder %s64, %s65
      %p79 = scmp.eq.s32.totalorder %s17, 1
      %p80 = por %p78, %p79
      %p82 = scmp.ne.s32.totalorder %s65, %s81
      %p83 = scmp.eq.s32.totalorder %s17, 0
      %p84 = por %p82, %p83
      %s85 = ssub.s32 %s18, %s30
      %p86 = scmp.eq.s32.totalorder %s85, 0
      %s88 = sadd.s32 %s87, 1
      %s89 = scalar_select %p86, %s87, %s88
      %p92 = pneg %p86
      %p93 = scmp.eq.s32.totalorder %s11, 1
      %p94 = por %p92, %p93
      %p95 = scmp.ne.s32.totalorder %s87, %s90
      %p96 = scmp.eq.s32.totalorder %s11, 0
      %p97 = por %p95, %p96
      %p98 = scmp.ne.s32.totalorder %s87, %s90
      %p99 = scmp.eq.s32.totalorder %s16, 1
      %p100 = por %p98, %p99
      %p101 = scmp.ne.s32.totalorder %s90, %s91
      %p102 = scmp.eq.s32.totalorder %s16, 0
      %p103 = por %p101, %p102
      %p104 = scmp.ne.s32.totalorder %s90, %s91
      %p105 = scmp.eq.s32.totalorder %s17, 1
      %p106 = por %p104, %p105
      %p108 = scmp.ne.s32.totalorder %s91, %s107
      %p109 = scmp.eq.s32.totalorder %s17, 0
      %p110 = por %p108, %p109
      %p111 = scmp.le.s32.totalorder 1, %s11
      %p112 = scmp.lt.s32.totalorder %s11, 3
      %p113 = pnand %p111, %p112
      %p114 = pneg %p113
      // Predicated region
      $region9: #{tpu_custom_call.1} parent=5 // pred_check
        _
      $region10: #{tpu_custom_call.1} parent=5 // pred_check_branch
        %116 = sbr.rel (%p113) target = $region12
      $region11: #{tpu_custom_call.1} parent=5 // pred_region
        %s117 = ssub.s32 %s11, 1
        // Predicated region
        $region13: #{tpu_custom_call.1} parent=11 // pred_check
          %p118 = pneg %p77
        $region14: #{tpu_custom_call.1} parent=11 // pred_check_branch
          %120 = sbr.rel (%p118) target = $region16
        $region15: #{tpu_custom_call.1} parent=11 // pred_region
          %s121 = smul.u32 4, %s21
          %p122 = scmp.lt.s32.totalorder %s121, 3
          %s123 = scalar_select %p122, %s121, 3
          %s124 = smul.addr %s123, 4
          %s125 = scalar_lea.vmem %s1, %s124
          %s126 = smul.u32 4, %s21
        $region16: #{tpu_custom_call.1} parent=11 // pred_fallthru
          _
      $region12: #{tpu_custom_call.1} parent=5 // pred_fallthru
        _
      %p127 = scmp.lt.s32.totalorder %s11, 2
      // Predicated region
      $region17: #{tpu_custom_call.1} parent=5 // pred_check
        %p128 = pneg %p127
      $region18: #{tpu_custom_call.1} parent=5 // pred_check_branch
        %130 = sbr.rel (%p128) target = $region20
      $region19: #{tpu_custom_call.1} parent=5 // pred_region
        // Predicated region
        $region21: #{tpu_custom_call.1} parent=19 // pred_check
          %p131 = pneg %p45
        $region22: #{tpu_custom_call.1} parent=19 // pred_check_branch
          %133 = sbr.rel (%p131) target = $region24
        $region23: #{tpu_custom_call.1} parent=19 // pred_region
          %s134 = smul.u32 4, %s18
          %p135 = scmp.lt.s32.totalorder %s134, 7
          %s136 = scalar_select %p135, %s134, 7
          %p137 = scmp.lt.s32.totalorder %s19, 0
          %s138 = scalar_select %p137, %s19, 0
          %s139 = sadd.s32 %s138, %s136
          %s140 = smul.addr %s139, 4
          %s141 = scalar_lea.vmem %s0, %s140
          %s142 = smul.u32 4, %s18
        $region24: #{tpu_custom_call.1} parent=19 // pred_fallthru
          _
      $region20: #{tpu_custom_call.1} parent=5 // pred_fallthru
        _
      %p143 = scmp.le.s32.totalorder 1, %s11
      %p144 = scmp.lt.s32.totalorder %s11, 3
      %p145 = pnand %p143, %p144
      %p146 = pneg %p145
      // Predicated region
      $region25: #{tpu_custom_call.1} parent=5 // pred_check
        _
      $region26: #{tpu_custom_call.1} parent=5 // pred_check_branch
        %148 = sbr.rel (%p145) target = $region28
      $region27: #{tpu_custom_call.1} parent=5 // pred_region
        %s149 = ssub.s32 %s11, 1
        %s150 = smul.u32 4, %s20
        %p151 = scmp.lt.s32.totalorder %s150, 7
        %s152 = scalar_select %p151, %s150, 7
        %p153 = scmp.lt.s32.totalorder %s21, 0
        %s154 = scalar_select %p153, %s21, 0
        %s155 = sadd.s32 %s154, %s152
        %s156 = smul.addr %s155, 4
        %s157 = scalar_lea.vmem %s0, %s156
        %p158 = pneg %p51
        %p159 = pneg %p48
        %s160 = smul.u32 4, %s21
        %p161 = scmp.lt.s32.totalorder %s160, 3
        %s162 = scalar_select %p161, %s160, 3
        %s163 = smul.addr %s162, 4
        %s164 = scalar_lea.vmem %s1, %s163
        %p165 = pneg %p77
        %p166 = pneg %p74
        %p167 = pneg %p103
        %p168 = pneg %p100
        %s169 = sand.u32 %s90, 1
        %s170 = scalar_lea.sflag [#allocation4], %s169
        %s171 = sand.u32 %s90, 1
        %s172 = smul.addr %s171, 16
        %s173 = scalar_lea.vmem [#allocation3], %s172
        %s174 = smul.u32 4, %s20
        %p175 = scmp.lt.s32.totalorder %s174, 7
        %s176 = scalar_select %p175, %s174, 7
        %p177 = scmp.lt.s32.totalorder %s21, 0
        %s178 = scalar_select %p177, %s21, 0
        %s179 = sadd.s32 %s178, %s176
        %s180 = smul.addr %s179, 4
        %s181 = scalar_lea.vmem %s0, %s180
        %s182 = smul.u32 4, %s20
        %s183 = smul.u32 4, %s21
        %p184 = scmp.lt.s32.totalorder %s183, 3
        %s185 = scalar_select %p184, %s183, 3
        %s186 = smul.addr %s185, 4
        %s187 = scalar_lea.vmem %s1, %s186
        %s188 = smul.u32 4, %s21
        %s189 = smul.u32 4, %s20
        %p191 = scmp.eq.s32.totalorder %s21, 0
        // Predicated region
        $region29: #{tpu_custom_call.1} parent=27 // pred_check
          %p192 = pneg %p191
        $region30: #{tpu_custom_call.1} parent=27 // pred_check_branch
          %194 = sbr.rel (%p192) target = $region32
        $region31: #{tpu_custom_call.1} parent=27 // pred_region
          %195 = vst [vmem:[#allocation2] sm:$0xff] 0.0
          %196 = vst [vmem:[#allocation2 + $0x8] sm:$0xff] 0.0
          %197 = vst [vmem:[#allocation2 + $0x10] sm:$0xff] 0.0
          %198 = vst [vmem:[#allocation2 + $0x18] sm:$0xff] 0.0
        $region32: #{tpu_custom_call.1} parent=27 // pred_fallthru
          _
        %v199 = vld [vmem:[#allocation2] sm:$0xff]
        %v200 = vld [vmem:[#allocation2 + $0x8] sm:$0xff]
        %v201 = vld [vmem:[#allocation2 + $0x10] sm:$0xff]
        %v202 = vld [vmem:[#allocation2 + $0x18] sm:$0xff]
        %v203 = vld [vmem:[%s181] sm:$0xf]
        %v204 = vld [vmem:[%s181 + $0x4] sm:$0xf]
        %v205 = vld [vmem:[%s181 + $0x8] sm:$0xf]
        %v206 = vld [vmem:[%s181 + $0xc] sm:$0xf]
        %v207 = vld [vmem:[%s187] sm:$0xf]
        %v208 = vld [vmem:[%s187 + $0x4] sm:$0xf]
        %v209 = vld [vmem:[%s187 + $0x8] sm:$0xf]
        %v210 = vld [vmem:[%s187 + $0xc] sm:$0xf]
        %v215 = vunpack.c.l.b16 %v203
        %v216 = vunpack.c.l.b16 %v204
        %v217 = vunpack.c.l.b16 %v205
        %v218 = vunpack.c.l.b16 %v206
        %v219 = vpack.c.b16 %v216, %v215
        %v220 = vpack.c.b16 %v218, %v217
        %v225 = vunpack.c.l.b16 %v207
        %v226 = vunpack.c.l.b16 %v208
        %v227 = vunpack.c.l.b16 %v209
        %v228 = vunpack.c.l.b16 %v210
        %v229 = vpack.c.b16 %v226, %v225
        %v230 = vpack.c.b16 %v228, %v227
        %vm233 = vcmask 261120
        %v235 = vsel %vm233, %v219, 0
        %v238 = vsel %vm233, %v220, 0
        %240 = vmatprep.subr.bf16.mxu0 0
        %241 = vmatpush1.bf16.msra.mxu0 0
        %242 = vmatprep.subr.bf16.mxu0 0
        %243 = vmatpush1.bf16.msra.mxu0 0
        %244 = vmatprep.subr.bf16.mxu0 0
        %245 = vmatpush1.bf16.msra.mxu0 0
        %246 = vmatprep.subr.bf16.mxu0 0
        %247 = vmatpush1.bf16.msra.mxu0 0
        %248 = vmatprep.subr.bf16.mxu0 0
        %249 = vmatpush1.bf16.msra.mxu0 0
        %250 = vmatprep.subr.bf16.mxu0 0
        %251 = vmatpush1.bf16.msra.mxu0 0
        %252 = vmatprep.subr.bf16.mxu0 0
        %253 = vmatpush1.bf16.msra.mxu0 %v230
        %254 = vmatprep.subr.bf16.mxu0 0
        %255 = vmatpush1.bf16.msra.mxu0 %v229
        %256 = vmatprep.subr.bf16.mxu0 0
        %257 = vmatpush2.bf16.msra.mxu0 0
        %258 = vmatprep.subr.bf16.mxu0 0
        %259 = vmatpush2.bf16.msra.mxu0 0
        %260 = vmatprep.subr.bf16.mxu0 0
        %261 = vmatpush2.bf16.msra.mxu0 0
        %262 = vmatprep.subr.bf16.mxu0 0
        %263 = vmatpush2.bf16.msra.mxu0 0
        %264 = vmatprep.subr.bf16.mxu0 0
        %265 = vmatpush2.bf16.msra.mxu0 0
        %266 = vmatprep.subr.bf16.mxu0 0
        %267 = vmatpush2.bf16.msra.mxu0 0
        %268 = vmatprep.subr.bf16.mxu0 0
        %269 = vmatpush2.bf16.msra.mxu0 0
        %270 = vmatprep.subr.bf16.mxu0 0
        %271 = vmatpush2.bf16.msra.mxu0 0
        %272 = vmatprep.mubr.bf16.mxu0 0
        %273 = vmatmul.mubr.bf16.gmra.mxu0 %v235
        %v274 = vpop.f32.mrf.mxu0
        %v275 = vadd.f32 0.0, %v274
        %v276 = vpop.f32.mrf.mxu0
        %v277 = vpop.f32.mrf.mxu0
        %v278 = vadd.f32 0.0, %v277
        %v279 = vpop.f32.mrf.mxu0
        %280 = vmatprep.mubr.bf16.mxu0 0
        %281 = vmatmul.mubr.bf16.gmra.mxu0 %v238
        %v282 = vpop.f32.mrf.mxu0
        %v283 = vadd.f32 0.0, %v282
        %v284 = vpop.f32.mrf.mxu0
        %v285 = vpop.f32.mrf.mxu0
        %v286 = vadd.f32 0.0, %v285
        %v287 = vpop.f32.mrf.mxu0
        %288 = vdwg.mxu0
        %v289 = vadd.f32 %v199, %v275
        %v290 = vadd.f32 %v200, %v278
        %v291 = vadd.f32 %v201, %v283
        %v292 = vadd.f32 %v202, %v286
        %293 = vst [vmem:[#allocation2] sm:$0xff] %v289
        %294 = vst [vmem:[#allocation2 + $0x8] sm:$0xff] %v290
        %295 = vst [vmem:[#allocation2 + $0x10] sm:$0xff] %v291
        %296 = vst [vmem:[#allocation2 + $0x18] sm:$0xff] %v292
        // Predicated region
        $region33: #{tpu_custom_call.1} parent=27 // pred_check
          %p297 = pneg %p191
        $region34: #{tpu_custom_call.1} parent=27 // pred_check_branch
          %299 = sbr.rel (%p297) target = $region36
        $region35: #{tpu_custom_call.1} parent=27 // pred_region
          %v300 = vld [vmem:[#allocation2] sm:$0xff]
          %v301 = vld [vmem:[#allocation2 + $0x8] sm:$0xff]
          %v302 = vld [vmem:[#allocation2 + $0x10] sm:$0xff]
          %v303 = vld [vmem:[#allocation2 + $0x18] sm:$0xff]
          %v304 = vpack.c.bf16 %v301, %v300
          %v305 = vpack.c.bf16 %v303, %v302
          %v308 = vunpack.c.l.b16 %v304
          %v309 = vunpack.c.h.b16 %v304
          %v310 = vunpack.c.l.b16 %v305
          %v311 = vunpack.c.h.b16 %v305
          %v312 = vpack.c.b16 %v308, %v308
          %v313 = vpack.c.b16 %v309, %v309
          %v314 = vpack.c.b16 %v310, %v310
          %v315 = vpack.c.b16 %v311, %v311
          %320 = vst [vmem:[%s173] sm:$0xf] %v312
          %321 = vst [vmem:[%s173 + $0x4] sm:$0xf] %v313
          %322 = vst [vmem:[%s173 + $0x8] sm:$0xf] %v314
          %323 = vst [vmem:[%s173 + $0xc] sm:$0xf] %v315
        $region36: #{tpu_custom_call.1} parent=27 // pred_fallthru
          _
        %s324 = sand.u32 %s90, 1
        %s325 = scalar_lea.sflag [#allocation4], %s324
        %s326 = sand.u32 %s90, 1
        %s327 = smul.addr %s326, 16
        %s328 = scalar_lea.vmem [#allocation3], %s327
        // Predicated region
        $region37: #{tpu_custom_call.1} parent=27 // pred_check
          %p329 = pneg %p100
        $region38: #{tpu_custom_call.1} parent=27 // pred_check_branch
          %331 = sbr.rel (%p329) target = $region40
        $region39: #{tpu_custom_call.1} parent=27 // pred_region
          %s332 = smul.u32 4, %s20
          %s334 = ssub.s32 256, 256
          %335 = vsyncadd %s325, %s334
          %s336 = smul.addr %s332, 64
          %s337 = scalar_lea.hbm %s2, %s336
          %s338 = sshll.u32 %s328, 4
          %s339 = int_to_ptr.vmem [resolvable:$true] %s338
          %344 = dma.vmem_to_hbm [thread:$0]  %s339, 256, %s337, %s325, 64, 64, 4
        $region40: #{tpu_custom_call.1} parent=27 // pred_fallthru
          _
      $region28: #{tpu_custom_call.1} parent=5 // pred_fallthru
        _
      %p345 = scmp.le.s32.totalorder 2, %s11
      // Predicated region
      $region41: #{tpu_custom_call.1} parent=5 // pred_check
        %p346 = pneg %p345
      $region42: #{tpu_custom_call.1} parent=5 // pred_check_branch
        %348 = sbr.rel (%p346) target = $region44
      $region43: #{tpu_custom_call.1} parent=5 // pred_region
        %s349 = ssub.s32 %s11, 2
        // Predicated region
        $region45: #{tpu_custom_call.1} parent=43 // pred_check
          %p350 = pneg %p106
        $region46: #{tpu_custom_call.1} parent=43 // pred_check_branch
          %352 = sbr.rel (%p350) target = $region48
        $region47: #{tpu_custom_call.1} parent=43 // pred_region
          %s353 = sand.u32 %s91, 1
          %s354 = scalar_lea.sflag [#allocation4], %s353
          %s355 = sand.u32 %s91, 1
          %s356 = smul.addr %s355, 16
          %s357 = scalar_lea.vmem [#allocation3], %s356
          %358 = dma.done %s354, 256
        $region48: #{tpu_custom_call.1} parent=43 // pred_fallthru
          _
      $region44: #{tpu_custom_call.1} parent=5 // pred_fallthru
        _
    $region6: #{tpu_custom_call.1} parent=1 // loop_footer
      %s15 = sadd.s32 1, %s11
    $region7: #{tpu_custom_call.1} parent=1 // loop_footer_branch
      %10 = sbr.rel target = $region3
    $region8: #{tpu_custom_call.1} parent=1 // loop_exit
      _
    %359 = vsyncpa [#allocation4], 1
    %s360 = scalar_lea.sflag [#allocation4], 1
    %361 = vsyncpa %s360, 1

</llo_original>
